<compile_context>
chip_gen: v7x
topology: tpu7x:2x2x1
jax: 0.10.0
libtpu: 0.0.40
codegen_flags: <defaults>
</compile_context>

<pallas_src>
import jax
import jax.numpy as jnp
from jax.experimental import pallas as pl
from jax.experimental.pallas import tpu as pltpu


def _round_up(x, mult):
    return ((x + mult - 1) // mult) * mult


# ---------------------------------------------------------------------------
# Dense path: P = A @ B.T, computed as A @ Bt with Bt = B.T pre-transposed
# (lane-dense MXU RHS, no per-tile XLU transpose). Tiled over (m, n); the
# tiny rank dim r is one block.
# ---------------------------------------------------------------------------
def _matmul_a_bt_kernel(a_ref, bt_ref, o_ref):
    # a_ref: (tm, r), bt_ref: (r, tn) -> o_ref: (tm, tn) on the MXU.
    o_ref[...] = jnp.dot(
        a_ref[...], bt_ref[...], preferred_element_type=jnp.float32
    ).astype(o_ref.dtype)


def factorization_dense(A, B, *, tm=512, tn=1024, out_dtype=jnp.float32):
    m, r = A.shape
    n, _ = B.shape
    in_bytes = jnp.dtype(A.dtype).itemsize
    out_bytes = jnp.dtype(out_dtype).itemsize
    # bf16 output needs (16, 128) tiles for unmasked stores; f32 needs (8, 128).
    sub_align = 16 if out_bytes == 2 else 8

    Bt = B.T  # (r, n)

    # Generation-aware VMEM budget: half of physical, clipped to [16, 48] MiB.
    # v7x: 64 MiB physical -> 32 MiB budget; v5e/v6e: 128 MiB -> 48 MiB.
    try:
        vmem_phys = int(pltpu.get_tpu_info().vmem_capacity_bytes)
    except Exception:  # conservative (v7x-sized) fallback
        vmem_phys = 64 << 20
    vmem_cap = min(max(vmem_phys // 2, 16 << 20), 48 << 20)
    vmem_budget = vmem_cap - (4 << 20)  # headroom for compiler scratch/spill

    def vmem_need(tm_, tn_):
        # Double-buffered A tile + Bt tile + output tile.
        return 2 * (tm_ * r * in_bytes + r * tn_ * in_bytes + tm_ * tn_ * out_bytes)

    n_pad_full = _round_up(n, 128)

    # Clamp tm for small m while keeping sublane alignment.
    tm = _round_up(min(tm, _round_up(m, sub_align)), sub_align)

    if vmem_need(tm, n_pad_full) <= vmem_budget:
        # Full-row output tiles: Bt stays resident across the whole grid, each
        # writeback is one contiguous HBM region per row block.
        tn = n_pad_full
    else:
        tn = _round_up(min(tn, n_pad_full), 128)
        while vmem_need(tm, tn) > vmem_budget and tm > sub_align:
            tm = _round_up(tm // 2, sub_align)

    m_pad = _round_up(m, tm)
    grid_m = m_pad // tm
    # v7x has 2 TensorCores: keep an even number of tiles along the sharded m
    # axis so neither core idles (no effect on v5e/v6e).
    if grid_m > 1 and grid_m % 2 == 1 and tm >= 2 * sub_align:
        tm = _round_up(tm // 2, sub_align)
        m_pad = _round_up(m, tm)
        grid_m = m_pad // tm

    n_pad = _round_up(n, tn)
    grid_n = n_pad // tn

    # Padded rows/cols are zero and sliced off after the call.
    if m_pad != m:
        A = jnp.pad(A, ((0, m_pad - m), (0, 0)))
    if n_pad != n:
        Bt = jnp.pad(Bt, ((0, 0), (0, n_pad - n)))

    vmem_limit = min(max(vmem_need(tm, tn) + (4 << 20), 16 << 20), vmem_cap)

    # A's block index is constant across the inner j loop -> fetched once per i.
    # Bt is fetched once total if there is a single column block, otherwise it
    # is re-fetched every (i, j) step.
    bt_bytes = (n_pad if grid_n == 1 else grid_m * n_pad) * r * in_bytes
    cost = pl.CostEstimate(
        flops=2 * m_pad * n_pad * r,
        transcendentals=0,
        bytes_accessed=m_pad * r * in_bytes + bt_bytes + m_pad * n_pad * out_bytes,
    )

    out = pl.pallas_call(
        _matmul_a_bt_kernel,
        out_shape=jax.ShapeDtypeStruct((m_pad, n_pad), out_dtype),
        grid_spec=pltpu.PrefetchScalarGridSpec(
            num_scalar_prefetch=0,
            grid=(grid_m, grid_n),  # j (n) innermost: A block resident over j
            in_specs=[
                pl.BlockSpec((tm, r), lambda i, j: (i, 0)),
                pl.BlockSpec((r, tn), lambda i, j: (0, j)),
            ],
            out_specs=pl.BlockSpec((tm, tn), lambda i, j: (i, j)),
        ),
        compiler_params=pltpu.CompilerParams(
            dimension_semantics=("parallel", "parallel"),
            vmem_limit_bytes=vmem_limit,
        ),
        cost_estimate=cost,
    )(A, Bt)

    if m_pad != m or n_pad != n:
        out = out[:m, :n]
    return out


# ---------------------------------------------------------------------------
# ids path: P[k] = sum_r A[ids0[k], r] * B[ids1[k], r]
#
# Default: single fused XLA gather*mul*sum pass (per perf review the Pallas
# variant below is a net loss unless the gather itself is fused in-kernel,
# because it materializes the gathered (r, K) arrays in HBM and re-reads them).
# The Pallas rowdot kernel is kept for very large K / forced use, with large
# lane-dense tiles so the per-grid-step overhead is amortized.
# ---------------------------------------------------------------------------
def _rowdot_kernel(at_ref, bt_ref, o_ref):
    # at_ref, bt_ref: (r, tk) -> o_ref: (1, tk); sublane reduce, lane-dense out.
    o_ref[...] = jnp.sum(at_ref[...] * bt_ref[...], axis=0, keepdims=True)


def factorization_ids(A, B, ids, *, tk=1 << 16, pallas_min_k=1 << 20,
                      force_pallas=False):
    ids0, ids1 = ids[0], ids[1]
    K = ids0.shape[0]

    if not force_pallas and K < pallas_min_k:
        # Fused gather * mul * reduce in one XLA pass; beats the kernel below
        # which needs the gathered rows materialized in HBM first.
        return jnp.sum(A[ids0, :] * B[ids1, :], axis=1)

    r = A.shape[1]
    # TODO(synk): fuse the row gather in-kernel (scalar-prefetch ids0/ids1 into
    # SMEM via PrefetchScalarGridSpec, keep A/B in memory_space=pl.ANY and use
    # manual make_async_copy row gathers) to avoid materializing (r, K)
    # gathered arrays in HBM; kept as XLA glue here.
    At_sub = A[ids0, :].T  # (r, K): lane-dense, reduction over sublanes
    Bt_sub = B[ids1, :].T

    tk = _round_up(min(tk, _round_up(K, 128)), 128)
    K_pad = _round_up(K, tk)
    if K_pad != K:
        At_sub = jnp.pad(At_sub, ((0, 0), (0, K_pad - K)))
        Bt_sub = jnp.pad(Bt_sub, ((0, 0), (0, K_pad - K)))

    in_bytes = jnp.dtype(A.dtype).itemsize
    vmem_need = 2 * (2 * r * tk * in_bytes + tk * 4)
    vmem_limit = min(max(vmem_need + (4 << 20), 16 << 20), 48 << 20)

    out = pl.pallas_call(
        _rowdot_kernel,
        out_shape=jax.ShapeDtypeStruct((1, K_pad), jnp.float32),
        grid_spec=pltpu.PrefetchScalarGridSpec(
            num_scalar_prefetch=0,
            grid=(K_pad // tk,),
            in_specs=[
                pl.BlockSpec((r, tk), lambda i: (0, i)),
                pl.BlockSpec((r, tk), lambda i: (0, i)),
            ],
            out_specs=pl.BlockSpec((1, tk), lambda i: (0, i)),
        ),
        compiler_params=pltpu.CompilerParams(
            dimension_semantics=("parallel",),
            vmem_limit_bytes=vmem_limit,
        ),
    )(At_sub, Bt_sub)
    return out[0, :K]


if __name__ == "__main__":
    key = jax.random.PRNGKey(0)
    m, n, r = 64, 128, 8  # small shapes consistent with Factorization(m, n, r)
    kA, kB, kI0, kI1, kJ0, kJ1 = jax.random.split(key, 6)

    # Deterministic parameter init, mirroring torch.randn(m, r) * 0.01
    A = jax.random.normal(kA, (m, r), dtype=jnp.float32) * 0.01
    B = jax.random.normal(kB, (n, r), dtype=jnp.float32) * 0.01

    # ---- dense path: forward(ids=None) ----
    P = jax.block_until_ready(factorization_dense(A, B))
    P_ref = A @ B.T
    assert P.shape == (m, n)
    assert jnp.allclose(P, P_ref, atol=1e-6, rtol=1e-5)

    # ---- dense path, bf16 output (recommended on v5e: halves HBM writeback) ----
    P_bf16 = jax.block_until_ready(
        factorization_dense(A, B, out_dtype=jnp.bfloat16))
    assert P_bf16.dtype == jnp.bfloat16
    assert jnp.allclose(P_bf16.astype(jnp.float32), P_ref, atol=1e-4, rtol=2e-2)

    # ---- dense path with non-divisible shapes (exercises padding/cdiv) ----
    m2, n2 = 50, 200
    A2 = jax.random.normal(kJ0, (m2, r), dtype=jnp.float32) * 0.01
    B2 = jax.random.normal(kJ1, (n2, r), dtype=jnp.float32) * 0.01
    P2 = jax.block_until_ready(factorization_dense(A2, B2))
    assert P2.shape == (m2, n2)
    assert jnp.allclose(P2, A2 @ B2.T, atol=1e-6, rtol=1e-5)

    # ---- sparse path, small K (fused JAX, per perf review) ----
    K_small = 16
    ids_small = jnp.stack([
        jax.random.randint(kI0, (K_small,), 0, m),
        jax.random.randint(kI1, (K_small,), 0, n),
    ])
    P_ids = jax.block_until_ready(factorization_ids(A, B, ids_small))
    P_ids_ref = jnp.sum(A[ids_small[0]] * B[ids_small[1]], axis=1)
    assert P_ids.shape == (K_small,)
    assert jnp.allclose(P_ids, P_ids_ref, atol=1e-6, rtol=1e-5)

    # ---- sparse path, larger K: exercise the Pallas rowdot kernel explicitly,
    # ---- and check the (default) fused-jnp path agrees.
    K_large = 2048
    ids_large = jnp.stack([
        jax.random.randint(kI0, (K_large,), 0, m),
        jax.random.randint(kI1, (K_large,), 0, n),
    ])
    P_ids_l = jax.block_until_ready(
        factorization_ids(A, B, ids_large, force_pallas=True))
    P_ids_l_ref = jnp.sum(A[ids_large[0]] * B[ids_large[1]], axis=1)
    assert P_ids_l.shape == (K_large,)
    assert jnp.allclose(P_ids_l, P_ids_l_ref, atol=1e-6, rtol=1e-5)

    P_ids_d = jax.block_until_ready(factorization_ids(A, B, ids_large))
    assert jnp.allclose(P_ids_d, P_ids_l_ref, atol=1e-6, rtol=1e-5)

    print("KERNEL_OK")
</pallas_src>

<mosaic_0001>
module attributes {stable_mosaic.version = 11 : i64} {
  func.func @_matmul_a_bt_kernel(%arg0: i32, %arg1: i32, %arg2: memref<64x8xf32, #tpu.memory_space<vmem>>, %arg3: memref<8x128xf32, #tpu.memory_space<vmem>>, %arg4: memref<64x128xf32, #tpu.memory_space<vmem>>) attributes {dimension_semantics = [#tpu.dimension_semantics<parallel>, #tpu.dimension_semantics<parallel>], iteration_bounds = array<i64: 1, 1>, scalar_prefetch = 0 : i64, scratch_operands = 0 : i64, tpu.core_type = #tpu.core_type<tc>, window_params = [{transform_indices = @transform_0, window_bounds = array<i64: 64, 8>}, {transform_indices = @transform_1, window_bounds = array<i64: 8, 128>}, {transform_indices = @transform_2, window_bounds = array<i64: 64, 128>}]} {
    %c0 = arith.constant 0 : index
    %c0_0 = arith.constant 0 : index
    %0 = vector.load %arg2[%c0, %c0_0] : memref<64x8xf32, #tpu.memory_space<vmem>>, vector<64x8xf32>
    %c0_1 = arith.constant 0 : index
    %c0_2 = arith.constant 0 : index
    %1 = vector.load %arg3[%c0_1, %c0_2] : memref<8x128xf32, #tpu.memory_space<vmem>>, vector<8x128xf32>
    %cst = arith.constant dense<0.000000e+00> : vector<64x128xf32>
    %2 = tpu.matmul %0, %1, %cst {dimension_numbers = #tpu.dot_dimension_numbers<[1], [0], [0], [1], [0, 0, 1, 1], [], []>} : vector<64x8xf32>, vector<8x128xf32>, vector<64x128xf32> -> vector<64x128xf32>
    %c0_3 = arith.constant 0 : index
    %c0_4 = arith.constant 0 : index
    %3 = vector.load %arg4[%c0_3, %c0_4] : memref<64x128xf32, #tpu.memory_space<vmem>>, vector<64x128xf32>
    tpu.vector_store %arg4[%c0_3, %c0_4], %2 {strides = array<i32>} : memref<64x128xf32, #tpu.memory_space<vmem>>, vector<64x128xf32>,
    return
  }
  func.func @transform_0(%arg0: i32, %arg1: i32) -> (i32, i32) {
    %c0_i32 = arith.constant 0 : i32
    %c0_i32_0 = arith.constant 0 : i32
    return %arg0, %c0_i32 : i32, i32
  }
  func.func @transform_1(%arg0: i32, %arg1: i32) -> (i32, i32) {
    %c0_i32 = arith.constant 0 : i32
    %c0_i32_0 = arith.constant 0 : i32
    return %c0_i32, %arg1 : i32, i32
  }
  func.func @transform_2(%arg0: i32, %arg1: i32) -> (i32, i32) {
    %c0_i32 = arith.constant 0 : i32
    return %arg0, %arg1 : i32, i32
  }
}

</mosaic_0001>

<llo_original>
// kernel: tpu_custom_call.1
$region0: #{tpu_custom_call.1}
  #allocation0 [shape = 'u32[]', space=smem, size = 0x4, offset = 0x4, fixed_abs, tag = 'smem constant byte address 0x4 - core index']
  #allocation1 [shape = 'u32[144,128]{1,0:T(1,128)}', space=vmem, size = 0x12000, scoped, tag = 'internal scratch']
  %s0 = inlined_call_operand.vmem [shape: f32[64,8], index: 0, kind: input, shape index: {}]
  %s1 = inlined_call_operand.vmem [shape: f32[8,128], index: 1, kind: input, shape index: {}]
  %s2 = inlined_call_operand.hbm [shape: f32[64,128], index: 2, kind: output, shape index: {}]
  %s3 = sld [smem:[#allocation0]]
  $region18: #{tpu_custom_call.1} parent=0
    _
  %s5 = ssub.s32 1, %s3
  %s6 = scalar_select 0, %s5, %s3
  $region1: #{tpu_custom_call.1} parent=0
    #allocation2 [shape = 'u8[32768]{0}', space=vmem, size = 0x8000, scoped, tag = 'output window, operand 0, single buffered']
    #allocation3 [shape = 's32[1]{0}', space=sflag, size = 0x4, scoped, tag = 'scoped memory for tpu_custom_call.1']
    %7 = vsyncpa [#allocation3], 0
    // Predicated region
    $region2: #{tpu_custom_call.1} parent=1 // pred_check
      _
    $region3: #{tpu_custom_call.1} parent=1 // pred_check_branch
      %9 = sbr.rel (0) target = $region5
    $region4: #{tpu_custom_call.1} parent=1 // pred_region
      _
    $region5: #{tpu_custom_call.1} parent=1 // pred_fallthru
      _
    // Predicated region
    $region6: #{tpu_custom_call.1} parent=1 // pred_check
      _
    $region7: #{tpu_custom_call.1} parent=1 // pred_check_branch
      %11 = sbr.rel (0) target = $region9
    $region8: #{tpu_custom_call.1} parent=1 // pred_region
      _
    $region9: #{tpu_custom_call.1} parent=1 // pred_fallthru
      _
    %v12 = vld [vmem:[%s0] sm:$0xff]
    %v13 = vld [vmem:[%s0 + $0x8] sm:$0xff]
    %v14 = vld [vmem:[%s0 + $0x10] sm:$0xff]
    %v15 = vld [vmem:[%s0 + $0x18] sm:$0xff]
    %v16 = vld [vmem:[%s0 + $0x20] sm:$0xff]
    %v17 = vld [vmem:[%s0 + $0x28] sm:$0xff]
    %v18 = vld [vmem:[%s0 + $0x30] sm:$0xff]
    %v19 = vld [vmem:[%s0 + $0x38] sm:$0xff]
    %v20 = vld [vmem:[%s1] sm:$0xff]
    %vm21 = vcmask 64512
    %v23 = vsel %vm21, %v12, 0
    %v26 = vsel %vm21, %v13, 0
    %v29 = vsel %vm21, %v14, 0
    %v32 = vsel %vm21, %v15, 0
    %v35 = vsel %vm21, %v16, 0
    %v38 = vsel %vm21, %v17, 0
    %v41 = vsel %vm21, %v18, 0
    %v44 = vsel %vm21, %v19, 0
    %46 = vmatprep.subr.mxu0 0.0
    %47 = vmatpush1.msra.mxu0 %v20
    %48 = vmatprep.subr.mxu0 0.0
    %49 = vmatpush1.msra.mxu0 0.0
    %50 = vmatprep.subr.mxu0 0.0
    %51 = vmatpush1.msra.mxu0 0.0
    %52 = vmatprep.subr.mxu0 0.0
    %53 = vmatpush1.msra.mxu0 0.0
    %54 = vmatprep.subr.mxu0 0.0
    %55 = vmatpush1.msra.mxu0 0.0
    %56 = vmatprep.subr.mxu0 0.0
    %57 = vmatpush1.msra.mxu0 0.0
    %58 = vmatprep.subr.mxu0 0.0
    %59 = vmatpush1.msra.mxu0 0.0
    %60 = vmatprep.subr.mxu0 0.0
    %61 = vmatpush1.msra.mxu0 0.0
    %62 = vmatprep.subr.mxu0 0.0
    %63 = vmatpush1.msra.mxu0 0.0
    %64 = vmatprep.subr.mxu0 0.0
    %65 = vmatpush1.msra.mxu0 0.0
    %66 = vmatprep.subr.mxu0 0.0
    %67 = vmatpush1.msra.mxu0 0.0
    %68 = vmatprep.subr.mxu0 0.0
    %69 = vmatpush1.msra.mxu0 0.0
    %70 = vmatprep.subr.mxu0 0.0
    %71 = vmatpush1.msra.mxu0 0.0
    %72 = vmatprep.subr.mxu0 0.0
    %73 = vmatpush1.msra.mxu0 0.0
    %74 = vmatprep.subr.mxu0 0.0
    %75 = vmatpush1.msra.mxu0 0.0
    %76 = vmatprep.subr.mxu0 0.0
    %77 = vmatpush1.msra.mxu0 0.0
    %78 = vmatprep.subr.mxu0 0.0
    %79 = vmatpush1.msra.mxu0 0.0
    %80 = vmatprep.subr.mxu0 0.0
    %81 = vmatpush1.msra.mxu0 0.0
    %82 = vmatprep.subr.mxu0 0.0
    %83 = vmatpush1.msra.mxu0 0.0
    %84 = vmatprep.subr.mxu0 0.0
    %85 = vmatpush1.msra.mxu0 0.0
    %86 = vmatprep.subr.mxu0 0.0
    %87 = vmatpush1.msra.mxu0 0.0
    %88 = vmatprep.subr.mxu0 0.0
    %89 = vmatpush1.msra.mxu0 0.0
    %90 = vmatprep.subr.mxu0 0.0
    %91 = vmatpush1.msra.mxu0 0.0
    %92 = vmatprep.subr.mxu0 0.0
    %93 = vmatpush1.msra.mxu0 0.0
    %94 = vmatprep.subr.mxu0 0.0
    %95 = vmatpush1.msra.mxu0 0.0
    %96 = vmatprep.subr.mxu0 0.0
    %97 = vmatpush1.msra.mxu0 0.0
    %98 = vmatprep.subr.mxu0 0.0
    %99 = vmatpush1.msra.mxu0 0.0
    %100 = vmatprep.subr.mxu0 0.0
    %101 = vmatpush1.msra.mxu0 0.0
    %102 = vmatprep.subr.mxu0 0.0
    %103 = vmatpush1.msra.mxu0 0.0
    %104 = vmatprep.subr.mxu0 0.0
    %105 = vmatpush1.msra.mxu0 0.0
    %106 = vmatprep.subr.mxu0 0.0
    %107 = vmatpush1.msra.mxu0 0.0
    %108 = vmatprep.subr.mxu0 0.0
    %109 = vmatpush1.msra.mxu0 0.0
    %110 = vmatprep.mubr.f32.mxu0 0.0
    %111 = vmatmul.mubr.f32.gmra.mrb[0].mxu0 %v23
    %v112 = vpop.f32.mrb[0].mxu0
    %v113 = vadd.f32 0.0, %v112
    %v114 = vpop.f32.mrb[0].mxu0
    %115 = vmatprep.mubr.f32.mxu0 0.0
    %116 = vmatmul.mubr.f32.gmra.mrb[0].mxu0 %v26
    %v117 = vpop.f32.mrb[0].mxu0
    %v118 = vadd.f32 0.0, %v117
    %v119 = vpop.f32.mrb[0].mxu0
    %120 = vmatprep.mubr.f32.mxu0 0.0
    %121 = vmatmul.mubr.f32.gmra.mrb[0].mxu0 %v29
    %v122 = vpop.f32.mrb[0].mxu0
    %v123 = vadd.f32 0.0, %v122
    %v124 = vpop.f32.mrb[0].mxu0
    %125 = vmatprep.mubr.f32.mxu0 0.0
    %126 = vmatmul.mubr.f32.gmra.mrb[0].mxu0 %v32
    %v127 = vpop.f32.mrb[0].mxu0
    %v128 = vadd.f32 0.0, %v127
    %v129 = vpop.f32.mrb[0].mxu0
    %130 = vmatprep.mubr.f32.mxu0 0.0
    %131 = vmatmul.mubr.f32.gmra.mrb[0].mxu0 %v35
    %v132 = vpop.f32.mrb[0].mxu0
    %v133 = vadd.f32 0.0, %v132
    %v134 = vpop.f32.mrb[0].mxu0
    %135 = vmatprep.mubr.f32.mxu0 0.0
    %136 = vmatmul.mubr.f32.gmra.mrb[0].mxu0 %v38
    %v137 = vpop.f32.mrb[0].mxu0
    %v138 = vadd.f32 0.0, %v137
    %v139 = vpop.f32.mrb[0].mxu0
    %140 = vmatprep.mubr.f32.mxu0 0.0
    %141 = vmatmul.mubr.f32.gmra.mrb[0].mxu0 %v41
    %v142 = vpop.f32.mrb[0].mxu0
    %v143 = vadd.f32 0.0, %v142
    %v144 = vpop.f32.mrb[0].mxu0
    %145 = vmatprep.mubr.f32.mxu0 0.0
    %146 = vmatmul.mubr.f32.gmra.mrb[0].mxu0 %v44
    %v147 = vpop.f32.mrb[0].mxu0
    %v148 = vadd.f32 0.0, %v147
    %v149 = vpop.f32.mrb[0].mxu0
    %150 = vdwg.mxu0
    %151 = vst [vmem:[#allocation2] sm:$0xff] %v113
    %152 = vst [vmem:[#allocation2 + $0x8] sm:$0xff] %v118
    %153 = vst [vmem:[#allocation2 + $0x10] sm:$0xff] %v123
    %154 = vst [vmem:[#allocation2 + $0x18] sm:$0xff] %v128
    %155 = vst [vmem:[#allocation2 + $0x20] sm:$0xff] %v133
    %156 = vst [vmem:[#allocation2 + $0x28] sm:$0xff] %v138
    %157 = vst [vmem:[#allocation2 + $0x30] sm:$0xff] %v143
    %158 = vst [vmem:[#allocation2 + $0x38] sm:$0xff] %v148
    // Predicated region
    $region10: #{tpu_custom_call.1} parent=1 // pred_check
      _
    $region11: #{tpu_custom_call.1} parent=1 // pred_check_branch
      %160 = sbr.rel (0) target = $region13
    $region12: #{tpu_custom_call.1} parent=1 // pred_region
      %s162 = ssub.s32 1024, 1024
      %163 = vsyncadd [#allocation3], %s162
      %s164 = sshll.u32 [#allocation2], 4
      %s165 = int_to_ptr.vmem [resolvable:$true] %s164
      %170 = dma.vmem_to_hbm [thread:$0]  %s165, 1024, %s2, [#allocation3], 128, 128, 8
    $region13: #{tpu_custom_call.1} parent=1 // pred_fallthru
      _
    // Predicated region
    $region14: #{tpu_custom_call.1} parent=1 // pred_check
      _
    $region15: #{tpu_custom_call.1} parent=1 // pred_check_branch
      %172 = sbr.rel (0) target = $region17
    $region16: #{tpu_custom_call.1} parent=1 // pred_region
      %173 = dma.done [#allocation3], 1024
    $region17: #{tpu_custom_call.1} parent=1 // pred_fallthru
      _
    %174 = vsyncpa [#allocation3], 1

</llo_original>
